<compile_context>
chip_gen: v7x
topology: tpu7x:2x2x1
jax: 0.10.0
libtpu: 0.0.40
codegen_flags: <defaults>
</compile_context>

<pallas_src>
import functools
from typing import NamedTuple

import jax
import jax.numpy as jnp
from jax.experimental import pallas as pl
from jax.experimental.pallas import tpu as pltpu


def _round_up(x, m):
    return ((x + m - 1) // m) * m


@functools.lru_cache(maxsize=None)
def _tpu_tile_caps():
    """(tm_cap, tn_cap, tk_cap, vmem_budget_bytes) per chip generation."""
    tm_cap = tn_cap = 512
    tk_cap = 1024
    vmem_budget = 48 << 20
    try:
        info = pltpu.get_tpu_info()
        vmem = getattr(info, "vmem_capacity_bytes", None)
        if vmem is not None:
            if vmem >= (100 << 20):
                # v5e / v6e: 128 MiB physical VMEM. 1024-square tiles exceed the
                # v5e ridge (~240 FLOP/byte) and approach the v6e ridge (~680).
                tm_cap = tn_cap = 1024
                tk_cap = 2048
                vmem_budget = 100 << 20
            else:
                # v7x: 64 MiB physical VMEM, ridge ~310 FLOP/byte.
                tm_cap = tn_cap = 768
                tk_cap = 1024
                vmem_budget = 44 << 20
    except Exception:
        pass
    return tm_cap, tn_cap, tk_cap, vmem_budget


def _pick_tile(dim, cap, step):
    """Largest tile <= cap (multiple of `step`) minimizing padding of `dim`."""
    if dim <= cap:
        return dim
    best, best_pad = step, None
    t = step
    while t <= cap:
        padded = _round_up(dim, t)
        if best_pad is None or padded <= best_pad:
            best, best_pad = t, padded
        t += step
    return best


# ----------------------------------------------------------------------------
# Kernel
# ----------------------------------------------------------------------------
def _gmp_matmul_kernel(x_ref, wt_ref, sb_ref, o_ref, acc_ref):
    """One (tm, tn) output tile, accumulating over the k grid axis.

    x_ref:   (tm, tk)  activations tile (compute dtype)
    wt_ref:  (tk, tn)  pre-transposed theta tile (compute dtype)
    sb_ref:  (2,  tn)  row 0 = r / max(||theta||, eps), row 1 = bias   (f32)
    acc_ref: (tm, tn)  f32 accumulator scratch (persists across k)
    """
    k = pl.program_id(2)

    @pl.when(k == 0)
    def _():
        acc_ref[...] = jnp.zeros_like(acc_ref)

    acc_ref[...] += jnp.dot(x_ref[...], wt_ref[...],
                            preferred_element_type=jnp.float32)

    @pl.when(k == pl.num_programs(2) - 1)
    def _():
        sb = sb_ref[...]
        out = acc_ref[...] * sb[0:1, :] + sb[1:2, :]
        o_ref[...] = out.astype(o_ref.dtype)


# ----------------------------------------------------------------------------
# Weight preparation (run once; reuse across forward calls)
# ----------------------------------------------------------------------------
class GmpParams(NamedTuple):
    wt: jax.Array           # (Ip, Op) pre-transposed, padded, compute dtype
    scale_bias: jax.Array   # (2, Op)  f32: [scale; bias], padded
    out_features: int       # original O
    tn: int                 # output tile width
    tk: int                 # reduction tile depth


def prepare_gmp_params(theta, r, bias, compute_dtype=jnp.bfloat16):
    """theta: [O, I]; r: [O, 1]; bias: [O].  One-time weight preprocessing."""
    O, I = theta.shape
    _, tn_cap, tk_cap, _ = _tpu_tile_caps()

    # Never drop to 128-wide MXU tiles: pad O and I up to >= 256-multiples.
    Op0 = _round_up(O, 256)
    Ip0 = _round_up(I, 256)
    tn = _pick_tile(Op0, tn_cap, 256)
    tk = _pick_tile(Ip0, tk_cap, 256)
    Op = _round_up(Op0, tn)
    Ip = _round_up(Ip0, tk)

    theta_f32 = theta.astype(jnp.float32)
    norm = jnp.sqrt(jnp.sum(theta_f32 * theta_f32, axis=1, keepdims=True))  # (O, 1)
    # Matches torch F.normalize(p=2, dim=1, eps=1e-12), folded with r.
    scale = (r.astype(jnp.float32) / jnp.maximum(norm, 1e-12)).reshape(1, O)
    sb = jnp.concatenate([scale, bias.astype(jnp.float32).reshape(1, O)], axis=0)
    sb = jnp.pad(sb, ((0, 0), (0, Op - O)))                                 # (2, Op)

    wt = jnp.pad(theta_f32.T, ((0, Ip - I), (0, Op - O))).astype(compute_dtype)

    return GmpParams(wt=wt, scale_bias=sb, out_features=O, tn=tn, tk=tk)


# ----------------------------------------------------------------------------
# Forward
# ----------------------------------------------------------------------------
@functools.partial(jax.jit, static_argnames=("out_features", "tn", "tk"))
def _gmp_apply(x, wt, scale_bias, *, out_features, tn, tk):
    """x: [..., I]; wt: (Ip, Op); scale_bias: (2, Op) -> [..., out_features]."""
    *batch, I = x.shape
    M = 1
    for d in batch:
        M *= d
    Ip, Op = wt.shape
    in_dtype = wt.dtype
    out_dtype = x.dtype
    O = out_features

    tm_cap, _, _, vmem_budget = _tpu_tile_caps()
    in_item = jnp.dtype(in_dtype).itemsize
    out_item = jnp.dtype(out_dtype).itemsize

    # bf16 packs 2 rows per sublane -> align M to 16 rows (8 for 32-bit).
    m_align = 16 if in_item < 4 else 8
    Mp0 = _round_up(max(M, 1), m_align)
    tm = _pick_tile(Mp0, tm_cap, 256)
    Mp = _round_up(Mp0, tm)

    # ---- x prologue: only reshape/cast/pad when actually required ----
    x2 = x.reshape(M, I)
    if x2.dtype != in_dtype:
        x2 = x2.astype(in_dtype)
    if (Mp != M) or (Ip != I):
        x2 = jnp.pad(x2, ((0, Mp - M), (0, Ip - I)))

    grid = (Mp // tm, Op // tn, Ip // tk)

    # Double-buffered working set -> scoped VMEM limit (with 2x slack, capped
    # below the per-generation physical budget).
    ws = (2 * tm * tk * in_item          # x tiles
          + 2 * tk * tn * in_item        # theta^T tiles
          + tm * tn * 4                  # f32 accumulator scratch
          + 2 * tm * tn * out_item       # output tiles
          + 2 * 2 * tn * 4)              # scale/bias tiles
    vmem_limit = int(min(vmem_budget, max(2 * ws, 32 << 20)))

    out = pl.pallas_call(
        _gmp_matmul_kernel,
        out_shape=jax.ShapeDtypeStruct((Mp, Op), out_dtype),
        grid_spec=pltpu.PrefetchScalarGridSpec(
            num_scalar_prefetch=0,
            grid=grid,
            in_specs=[
                pl.BlockSpec((tm, tk), lambda i, j, k: (i, k)),   # x rows tile
                pl.BlockSpec((tk, tn), lambda i, j, k: (k, j)),   # theta^T tile
                pl.BlockSpec((2, tn), lambda i, j, k: (0, j)),    # [scale; bias]
            ],
            out_specs=pl.BlockSpec((tm, tn), lambda i, j, k: (i, j)),
            scratch_shapes=[pltpu.VMEM((tm, tn), jnp.float32)],
        ),
        compiler_params=pltpu.CompilerParams(
            dimension_semantics=("parallel", "parallel", "arbitrary"),
            vmem_limit_bytes=vmem_limit),
    )(x2, wt, scale_bias)

    return out[:M, :O].reshape(*batch, O)


def gmp_forward(x, params: GmpParams):
    """Forward with pre-prepared (cached) weights."""
    return _gmp_apply(x, params.wt, params.scale_bias,
                      out_features=params.out_features,
                      tn=params.tn, tk=params.tk)


def gmp_layer(x, theta, r, bias, *, compute_dtype=jnp.bfloat16):
    """Convenience one-shot path (re-runs weight prep; prefer prepare+forward)."""
    params = prepare_gmp_params(theta, r, bias, compute_dtype=compute_dtype)
    return gmp_forward(x, params)


# ----------------------------------------------------------------------------
# Reference & init
# ----------------------------------------------------------------------------
def init_params(key, out_features, in_features):
    """Deterministic init matching GmPLayer.__init__ shapes/ranges.

    kaiming_uniform_(a=sqrt(5)) on [O, I] gives U(-1/sqrt(I), 1/sqrt(I));
    r and bias also use U(-1/sqrt(I), 1/sqrt(I)).
    """
    k1, k2, k3 = jax.random.split(key, 3)
    bound = 1.0 / jnp.sqrt(jnp.float32(in_features))
    theta = jax.random.uniform(k1, (out_features, in_features),
                               jnp.float32, -bound, bound)
    r = jax.random.uniform(k2, (out_features, 1), jnp.float32, -bound, bound)
    bias = jax.random.uniform(k3, (out_features,), jnp.float32, -bound, bound)
    return theta, r, bias


def gmp_ref(x, theta, r, bias):
    """Pure-JAX reference (mirrors the PyTorch forward literally)."""
    norm = jnp.sqrt(jnp.sum(theta * theta, axis=1, keepdims=True))
    u = theta / jnp.maximum(norm, 1e-12)
    w = r * u
    return jnp.einsum("bsi,oi->bso", x, w) + bias


if __name__ == "__main__":
    key = jax.random.PRNGKey(0)
    kx, kp = jax.random.split(key)

    B, S, I, O = 2, 8, 32, 16
    x = jax.random.normal(kx, (B, S, I), jnp.float32)
    theta, r, bias = init_params(kp, O, I)

    ref = gmp_ref(x, theta, r, bias)

    # Prepared-weights path (default bf16 MXU, f32 accumulation + f32 epilogue).
    params = prepare_gmp_params(theta, r, bias)
    out = jax.block_until_ready(gmp_forward(x, params))
    assert out.shape == (B, S, O)
    assert jnp.allclose(out, ref, atol=5e-2, rtol=5e-2), "bf16 mismatch vs reference"

    # f32 MXU path, tight tolerance.
    params_f32 = prepare_gmp_params(theta, r, bias, compute_dtype=jnp.float32)
    out_f32 = jax.block_until_ready(gmp_forward(x, params_f32))
    assert out_f32.shape == (B, S, O)
    assert jnp.allclose(out_f32, ref, atol=1e-4, rtol=1e-4), "f32 mismatch vs reference"

    # Convenience one-shot path.
    out2 = jax.block_until_ready(gmp_layer(x, theta, r, bias))
    assert jnp.allclose(out2, ref, atol=5e-2, rtol=5e-2), "one-shot mismatch vs reference"

    print("KERNEL_OK")
</pallas_src>

<mosaic_0001>
module attributes {stable_mosaic.version = 11 : i64} {
  func.func @_gmp_matmul_kernel(%arg0: i32, %arg1: i32, %arg2: i32, %arg3: memref<16x256xbf16, #tpu.memory_space<vmem>>, %arg4: memref<256x256xbf16, #tpu.memory_space<vmem>>, %arg5: memref<2x256xf32, #tpu.memory_space<vmem>>, %arg6: memref<16x256xf32, #tpu.memory_space<vmem>>, %arg7: memref<16x256xf32, #tpu.memory_space<vmem>>) attributes {dimension_semantics = [#tpu.dimension_semantics<parallel>, #tpu.dimension_semantics<parallel>, #tpu.dimension_semantics<arbitrary>], iteration_bounds = array<i64: 1, 1, 1>, scalar_prefetch = 0 : i64, scratch_operands = 1 : i64, tpu.core_type = #tpu.core_type<tc>, window_params = [{transform_indices = @transform_0, window_bounds = array<i64: 16, 256>}, {transform_indices = @transform_1, window_bounds = array<i64: 256, 256>}, {transform_indices = @transform_2, window_bounds = array<i64: 2, 256>}, {transform_indices = @transform_3, window_bounds = array<i64: 16, 256>}]} {
    %c0_i32 = arith.constant 0 : i32
    %0 = arith.cmpi eq, %arg2, %c0_i32 : i32
    %1 = arith.extui %0 : i1 to i32
    %c0_i32_0 = arith.constant 0 : i32
    %2 = arith.cmpi ne, %1, %c0_i32_0 : i32
    scf.if %2 {
      %cst_10 = arith.constant 0.000000e+00 : f32
      %12 = vector.broadcast %cst_10 : f32 to vector<16x256xf32>
      %c0_11 = arith.constant 0 : index
      %c0_12 = arith.constant 0 : index
      %13 = vector.load %arg7[%c0_11, %c0_12] : memref<16x256xf32, #tpu.memory_space<vmem>>, vector<16x256xf32>
      tpu.vector_store %arg7[%c0_11, %c0_12], %12 {strides = array<i32>} : memref<16x256xf32, #tpu.memory_space<vmem>>, vector<16x256xf32>,
    } else {
    }
    %c0 = arith.constant 0 : index
    %c0_1 = arith.constant 0 : index
    %3 = vector.load %arg7[%c0, %c0_1] : memref<16x256xf32, #tpu.memory_space<vmem>>, vector<16x256xf32>
    %c0_2 = arith.constant 0 : index
    %c0_3 = arith.constant 0 : index
    %4 = vector.load %arg3[%c0_2, %c0_3] : memref<16x256xbf16, #tpu.memory_space<vmem>>, vector<16x256xbf16>
    %c0_4 = arith.constant 0 : index
    %c0_5 = arith.constant 0 : index
    %5 = vector.load %arg4[%c0_4, %c0_5] : memref<256x256xbf16, #tpu.memory_space<vmem>>, vector<256x256xbf16>
    %cst = arith.constant dense<0.000000e+00> : vector<16x256xf32>
    %6 = tpu.matmul %4, %5, %cst {dimension_numbers = #tpu.dot_dimension_numbers<[1], [0], [0], [1], [0, 0, 1, 1], [], []>} : vector<16x256xbf16>, vector<256x256xbf16>, vector<16x256xf32> -> vector<16x256xf32>
    %7 = arith.addf %3, %6 : vector<16x256xf32>
    %c0_6 = arith.constant 0 : index
    %c0_7 = arith.constant 0 : index
    %8 = vector.load %arg7[%c0_6, %c0_7] : memref<16x256xf32, #tpu.memory_space<vmem>>, vector<16x256xf32>
    tpu.vector_store %arg7[%c0_6, %c0_7], %7 {strides = array<i32>} : memref<16x256xf32, #tpu.memory_space<vmem>>, vector<16x256xf32>,
    %c0_i32_8 = arith.constant 0 : i32
    %9 = arith.cmpi eq, %arg2, %c0_i32_8 : i32
    %10 = arith.extui %9 : i1 to i32
    %c0_i32_9 = arith.constant 0 : i32
    %11 = arith.cmpi ne, %10, %c0_i32_9 : i32
    scf.if %11 {
      %c0_10 = arith.constant 0 : index
      %c0_11 = arith.constant 0 : index
      %12 = vector.load %arg5[%c0_10, %c0_11] : memref<2x256xf32, #tpu.memory_space<vmem>>, vector<2x256xf32>
      %c0_12 = arith.constant 0 : index
      %c0_13 = arith.constant 0 : index
      %13 = vector.load %arg7[%c0_12, %c0_13] : memref<16x256xf32, #tpu.memory_space<vmem>>, vector<16x256xf32>
      %14 = vector.extract_strided_slice %12 {offsets = [0, 0], sizes = [1, 256], strides = [1, 1]} : vector<2x256xf32> to vector<1x256xf32>
      %15 = vector.broadcast %14 : vector<1x256xf32> to vector<16x256xf32>
      %16 = arith.mulf %13, %15 : vector<16x256xf32>
      %17 = vector.extract_strided_slice %12 {offsets = [1, 0], sizes = [1, 256], strides = [1, 1]} : vector<2x256xf32> to vector<1x256xf32>
      %18 = vector.broadcast %17 : vector<1x256xf32> to vector<16x256xf32>
      %19 = arith.addf %16, %18 : vector<16x256xf32>
      %c0_14 = arith.constant 0 : index
      %c0_15 = arith.constant 0 : index
      %20 = vector.load %arg6[%c0_14, %c0_15] : memref<16x256xf32, #tpu.memory_space<vmem>>, vector<16x256xf32>
      tpu.vector_store %arg6[%c0_14, %c0_15], %19 {strides = array<i32>} : memref<16x256xf32, #tpu.memory_space<vmem>>, vector<16x256xf32>,
    } else {
    }
    return
  }
  func.func @transform_0(%arg0: i32, %arg1: i32, %arg2: i32) -> (i32, i32) {
    %c0_i32 = arith.constant 0 : i32
    return %arg0, %arg2 : i32, i32
  }
  func.func @transform_1(%arg0: i32, %arg1: i32, %arg2: i32) -> (i32, i32) {
    %c0_i32 = arith.constant 0 : i32
    return %arg2, %arg1 : i32, i32
  }
  func.func @transform_2(%arg0: i32, %arg1: i32, %arg2: i32) -> (i32, i32) {
    %c0_i32 = arith.constant 0 : i32
    %c0_i32_0 = arith.constant 0 : i32
    return %c0_i32, %arg1 : i32, i32
  }
  func.func @transform_3(%arg0: i32, %arg1: i32, %arg2: i32) -> (i32, i32) {
    %c0_i32 = arith.constant 0 : i32
    return %arg0, %arg1 : i32, i32
  }
}

</mosaic_0001>

<llo_original>
// kernel: _gmp_apply.1
$region0: #{_gmp_apply.1}
  #allocation0 [shape = 'u32[]', space=smem, size = 0x4, offset = 0x4, fixed_abs, tag = 'smem constant byte address 0x4 - core index']
  #allocation1 [shape = 'u32[144,128]{1,0:T(1,128)}', space=vmem, size = 0x12000, scoped, tag = 'internal scratch']
  #allocation2 [shape = 'f32[16,256]{1,0:T(8,128)}', space=vmem, size = 0x4000, scoped, tag = 'scratch operand']
  %s0 = inlined_call_operand.vmem [shape: bf16[16,256], index: 0, kind: input, shape index: {}]
  %s1 = inlined_call_operand.hbm [shape: bf16[256,256], index: 1, kind: input, shape index: {}]
  %s2 = inlined_call_operand.vmem [shape: f32[2,256], index: 2, kind: input, shape index: {}]
  %s3 = inlined_call_operand.vmem [shape: f32[16,256], index: 3, kind: output, shape index: {}]
  %s4 = sld [smem:[#allocation0]]
  $region34: #{_gmp_apply.1} parent=0
    _
  %s6 = ssub.s32 1, %s4
  %s7 = scalar_select 0, %s6, %s4
  $region1: #{_gmp_apply.1} parent=0
    #allocation3 [shape = 'u8[131072]{0}', space=vmem, size = 0x20000, scoped, tag = 'input window, operand 1, single buffered']
    #allocation4 [shape = 's32[1]{0}', space=sflag, size = 0x4, scoped, tag = 'scoped memory for _gmp_apply.1']
    %8 = vsyncpa [#allocation4], 0
    // Predicated region
    $region2: #{_gmp_apply.1} parent=1 // pred_check
      _
    $region3: #{_gmp_apply.1} parent=1 // pred_check_branch
      %10 = sbr.rel (0) target = $region5
    $region4: #{_gmp_apply.1} parent=1 // pred_region
      _
    $region5: #{_gmp_apply.1} parent=1 // pred_fallthru
      _
    // Predicated region
    $region6: #{_gmp_apply.1} parent=1 // pred_check
      _
    $region7: #{_gmp_apply.1} parent=1 // pred_check_branch
      %12 = sbr.rel (0) target = $region9
    $region8: #{_gmp_apply.1} parent=1 // pred_region
      %s14 = ssub.s32 4096, 4096
      %15 = vsyncadd [#allocation4], %s14
      %s16 = sshll.u32 [#allocation3], 4
      %s17 = int_to_ptr.vmem [resolvable:$true] %s16
      %22 = dma.hbm_to_vmem [thread:$0]  %s1, 4096, %s17, [#allocation4], 128, 128, 8
    $region9: #{_gmp_apply.1} parent=1 // pred_fallthru
      _
    // Predicated region
    $region10: #{_gmp_apply.1} parent=1 // pred_check
      _
    $region11: #{_gmp_apply.1} parent=1 // pred_check_branch
      %24 = sbr.rel (0) target = $region13
    $region12: #{_gmp_apply.1} parent=1 // pred_region
      _
    $region13: #{_gmp_apply.1} parent=1 // pred_fallthru
      _
    // Predicated region
    $region14: #{_gmp_apply.1} parent=1 // pred_check
      _
    $region15: #{_gmp_apply.1} parent=1 // pred_check_branch
      %26 = sbr.rel (0) target = $region17
    $region16: #{_gmp_apply.1} parent=1 // pred_region
      %27 = dma.done [#allocation4], 4096
    $region17: #{_gmp_apply.1} parent=1 // pred_fallthru
      _
    %p28 = scmp.eq.s32.totalorder 0, 0
    // Predicated region
    $region18: #{_gmp_apply.1} parent=1 // pred_check
      %p29 = pneg %p28
    $region19: #{_gmp_apply.1} parent=1 // pred_check_branch
      %31 = sbr.rel (%p29) target = $region21
    $region20: #{_gmp_apply.1} parent=1 // pred_region
      %32 = vst [vmem:[#allocation2] sm:$0xff] 0.0
      %33 = vst [vmem:[#allocation2 + $0x8] sm:$0xff] 0.0
      %34 = vst [vmem:[#allocation2 + $0x10] sm:$0xff] 0.0
      %35 = vst [vmem:[#allocation2 + $0x18] sm:$0xff] 0.0
    $region21: #{_gmp_apply.1} parent=1 // pred_fallthru
      _
    %v36 = vld [vmem:[#allocation2] sm:$0xff]
    %v37 = vld [vmem:[#allocation2 + $0x8] sm:$0xff]
    %v38 = vld [vmem:[#allocation2 + $0x10] sm:$0xff]
    %v39 = vld [vmem:[#allocation2 + $0x18] sm:$0xff]
    %v40 = vld [vmem:[%s0] sm:$0xff]
    %v41 = vld [vmem:[%s0 + $0x8] sm:$0xff]
    %v42 = vld [vmem:[#allocation3] sm:$0xff]
    %v43 = vld [vmem:[#allocation3 + $0x8] sm:$0xff]
    %v44 = vld [vmem:[#allocation3 + $0x10] sm:$0xff]
    %v45 = vld [vmem:[#allocation3 + $0x18] sm:$0xff]
    %v46 = vld [vmem:[#allocation3 + $0x20] sm:$0xff]
    %v47 = vld [vmem:[#allocation3 + $0x28] sm:$0xff]
    %v48 = vld [vmem:[#allocation3 + $0x30] sm:$0xff]
    %v49 = vld [vmem:[#allocation3 + $0x38] sm:$0xff]
    %v50 = vld [vmem:[#allocation3 + $0x40] sm:$0xff]
    %v51 = vld [vmem:[#allocation3 + $0x48] sm:$0xff]
    %v52 = vld [vmem:[#allocation3 + $0x50] sm:$0xff]
    %v53 = vld [vmem:[#allocation3 + $0x58] sm:$0xff]
    %v54 = vld [vmem:[#allocation3 + $0x60] sm:$0xff]
    %v55 = vld [vmem:[#allocation3 + $0x68] sm:$0xff]
    %v56 = vld [vmem:[#allocation3 + $0x70] sm:$0xff]
    %v57 = vld [vmem:[#allocation3 + $0x78] sm:$0xff]
    %v58 = vld [vmem:[#allocation3 + $0x80] sm:$0xff]
    %v59 = vld [vmem:[#allocation3 + $0x88] sm:$0xff]
    %v60 = vld [vmem:[#allocation3 + $0x90] sm:$0xff]
    %v61 = vld [vmem:[#allocation3 + $0x98] sm:$0xff]
    %v62 = vld [vmem:[#allocation3 + $0xa0] sm:$0xff]
    %v63 = vld [vmem:[#allocation3 + $0xa8] sm:$0xff]
    %v64 = vld [vmem:[#allocation3 + $0xb0] sm:$0xff]
    %v65 = vld [vmem:[#allocation3 + $0xb8] sm:$0xff]
    %v66 = vld [vmem:[#allocation3 + $0xc0] sm:$0xff]
    %v67 = vld [vmem:[#allocation3 + $0xc8] sm:$0xff]
    %v68 = vld [vmem:[#allocation3 + $0xd0] sm:$0xff]
    %v69 = vld [vmem:[#allocation3 + $0xd8] sm:$0xff]
    %v70 = vld [vmem:[#allocation3 + $0xe0] sm:$0xff]
    %v71 = vld [vmem:[#allocation3 + $0xe8] sm:$0xff]
    %v72 = vld [vmem:[#allocation3 + $0xf0] sm:$0xff]
    %v73 = vld [vmem:[#allocation3 + $0xf8] sm:$0xff]
    %v76 = vunpack.c.l.b16 %v40
    %v77 = vunpack.c.h.b16 %v40
    %v78 = vunpack.c.l.b16 %v41
    %v79 = vunpack.c.h.b16 %v41
    %v80 = vpack.c.b16 %v78, %v76
    %v81 = vpack.c.b16 %v79, %v77
    %v116 = vunpack.c.l.b16 %v42
    %v117 = vunpack.c.h.b16 %v42
    %v118 = vunpack.c.l.b16 %v43
    %v119 = vunpack.c.h.b16 %v43
    %v120 = vunpack.c.l.b16 %v44
    %v121 = vunpack.c.h.b16 %v44
    %v122 = vunpack.c.l.b16 %v45
    %v123 = vunpack.c.h.b16 %v45
    %v124 = vunpack.c.l.b16 %v46
    %v125 = vunpack.c.h.b16 %v46
    %v126 = vunpack.c.l.b16 %v47
    %v127 = vunpack.c.h.b16 %v47
    %v128 = vunpack.c.l.b16 %v48
    %v129 = vunpack.c.h.b16 %v48
    %v130 = vunpack.c.l.b16 %v49
    %v131 = vunpack.c.h.b16 %v49
    %v132 = vunpack.c.l.b16 %v50
    %v133 = vunpack.c.h.b16 %v50
    %v134 = vunpack.c.l.b16 %v51
    %v135 = vunpack.c.h.b16 %v51
    %v136 = vunpack.c.l.b16 %v52
    %v137 = vunpack.c.h.b16 %v52
    %v138 = vunpack.c.l.b16 %v53
    %v139 = vunpack.c.h.b16 %v53
    %v140 = vunpack.c.l.b16 %v54
    %v141 = vunpack.c.h.b16 %v54
    %v142 = vunpack.c.l.b16 %v55
    %v143 = vunpack.c.h.b16 %v55
    %v144 = vunpack.c.l.b16 %v56
    %v145 = vunpack.c.h.b16 %v56
    %v146 = vunpack.c.l.b16 %v57
    %v147 = vunpack.c.h.b16 %v57
    %v148 = vunpack.c.l.b16 %v58
    %v149 = vunpack.c.h.b16 %v58
    %v150 = vunpack.c.l.b16 %v59
    %v151 = vunpack.c.h.b16 %v59
    %v152 = vunpack.c.l.b16 %v60
    %v153 = vunpack.c.h.b16 %v60
    %v154 = vunpack.c.l.b16 %v61
    %v155 = vunpack.c.h.b16 %v61
    %v156 = vunpack.c.l.b16 %v62
    %v157 = vunpack.c.h.b16 %v62
    %v158 = vunpack.c.l.b16 %v63
    %v159 = vunpack.c.h.b16 %v63
    %v160 = vunpack.c.l.b16 %v64
    %v161 = vunpack.c.h.b16 %v64
    %v162 = vunpack.c.l.b16 %v65
    %v163 = vunpack.c.h.b16 %v65
    %v164 = vunpack.c.l.b16 %v66
    %v165 = vunpack.c.h.b16 %v66
    %v166 = vunpack.c.l.b16 %v67
    %v167 = vunpack.c.h.b16 %v67
    %v168 = vunpack.c.l.b16 %v68
    %v169 = vunpack.c.h.b16 %v68
    %v170 = vunpack.c.l.b16 %v69
    %v171 = vunpack.c.h.b16 %v69
    %v172 = vunpack.c.l.b16 %v70
    %v173 = vunpack.c.h.b16 %v70
    %v174 = vunpack.c.l.b16 %v71
    %v175 = vunpack.c.h.b16 %v71
    %v176 = vunpack.c.l.b16 %v72
    %v177 = vunpack.c.h.b16 %v72
    %v178 = vunpack.c.l.b16 %v73
    %v179 = vunpack.c.h.b16 %v73
    %v180 = vpack.c.b16 %v118, %v116
    %v181 = vpack.c.b16 %v119, %v117
    %v182 = vpack.c.b16 %v122, %v120
    %v183 = vpack.c.b16 %v123, %v121
    %v184 = vpack.c.b16 %v126, %v124
    %v185 = vpack.c.b16 %v127, %v125
    %v186 = vpack.c.b16 %v130, %v128
    %v187 = vpack.c.b16 %v131, %v129
    %v188 = vpack.c.b16 %v134, %v132
    %v189 = vpack.c.b16 %v135, %v133
    %v190 = vpack.c.b16 %v138, %v136
    %v191 = vpack.c.b16 %v139, %v137
    %v192 = vpack.c.b16 %v142, %v140
    %v193 = vpack.c.b16 %v143, %v141
    %v194 = vpack.c.b16 %v146, %v144
    %v195 = vpack.c.b16 %v147, %v145
    %v196 = vpack.c.b16 %v150, %v148
    %v197 = vpack.c.b16 %v151, %v149
    %v198 = vpack.c.b16 %v154, %v152
    %v199 = vpack.c.b16 %v155, %v153
    %v200 = vpack.c.b16 %v158, %v156
    %v201 = vpack.c.b16 %v159, %v157
    %v202 = vpack.c.b16 %v162, %v160
    %v203 = vpack.c.b16 %v163, %v161
    %v204 = vpack.c.b16 %v166, %v164
    %v205 = vpack.c.b16 %v167, %v165
    %v206 = vpack.c.b16 %v170, %v168
    %v207 = vpack.c.b16 %v171, %v169
    %v208 = vpack.c.b16 %v174, %v172
    %v209 = vpack.c.b16 %v175, %v173
    %v210 = vpack.c.b16 %v178, %v176
    %v211 = vpack.c.b16 %v179, %v177
    %244 = vmatprep.subr.bf16.mxu0 %v181
    %245 = vmatpush1.bf16.msra.mxu0 %v180
    %246 = vmatprep.subr.bf16.mxu0 %v183
    %247 = vmatpush1.bf16.msra.mxu0 %v182
    %248 = vmatprep.subr.bf16.mxu0 %v185
    %249 = vmatpush1.bf16.msra.mxu0 %v184
    %250 = vmatprep.subr.bf16.mxu0 %v187
    %251 = vmatpush1.bf16.msra.mxu0 %v186
    %252 = vmatprep.subr.bf16.mxu0 %v189
    %253 = vmatpush1.bf16.msra.mxu0 %v188
    %254 = vmatprep.subr.bf16.mxu0 %v191
    %255 = vmatpush1.bf16.msra.mxu0 %v190
    %256 = vmatprep.subr.bf16.mxu0 %v193
    %257 = vmatpush1.bf16.msra.mxu0 %v192
    %258 = vmatprep.subr.bf16.mxu0 %v195
    %259 = vmatpush1.bf16.msra.mxu0 %v194
    %260 = vmatprep.subr.bf16.mxu0 %v197
    %261 = vmatpush1.bf16.msra.mxu0 %v196
    %262 = vmatprep.subr.bf16.mxu0 %v199
    %263 = vmatpush1.bf16.msra.mxu0 %v198
    %264 = vmatprep.subr.bf16.mxu0 %v201
    %265 = vmatpush1.bf16.msra.mxu0 %v200
    %266 = vmatprep.subr.bf16.mxu0 %v203
    %267 = vmatpush1.bf16.msra.mxu0 %v202
    %268 = vmatprep.subr.bf16.mxu0 %v205
    %269 = vmatpush1.bf16.msra.mxu0 %v204
    %270 = vmatprep.subr.bf16.mxu0 %v207
    %271 = vmatpush1.bf16.msra.mxu0 %v206
    %272 = vmatprep.subr.bf16.mxu0 %v209
    %273 = vmatpush1.bf16.msra.mxu0 %v208
    %274 = vmatprep.subr.bf16.mxu0 %v211
    %275 = vmatpush1.bf16.msra.mxu0 %v210
    %276 = vmatprep.mubr.bf16.mxu0 %v81
    %277 = vmatmul.mubr.bf16.gmra.mrb[0].mxu0 %v80
    %v278 = vpop.f32.mrb[0].mxu0
    %v279 = vadd.f32 0.0, %v278
    %v280 = vpop.f32.mrb[0].mxu0
    %v281 = vadd.f32 0.0, %v280
    %v282 = vpop.f32.mrb[0].mxu0
    %v283 = vadd.f32 0.0, %v282
    %v284 = vpop.f32.mrb[0].mxu0
    %v285 = vadd.f32 0.0, %v284
    %286 = vdwg.mxu0
    %v287 = vadd.f32 %v36, %v279
    %v288 = vadd.f32 %v37, %v281
    %v289 = vadd.f32 %v38, %v283
    %v290 = vadd.f32 %v39, %v285
    %291 = vst [vmem:[#allocation2] sm:$0xff] %v287
    %292 = vst [vmem:[#allocation2 + $0x8] sm:$0xff] %v288
    %293 = vst [vmem:[#allocation2 + $0x10] sm:$0xff] %v289
    %294 = vst [vmem:[#allocation2 + $0x18] sm:$0xff] %v290
    // Predicated region
    $region22: #{_gmp_apply.1} parent=1 // pred_check
      %p295 = pneg %p28
    $region23: #{_gmp_apply.1} parent=1 // pred_check_branch
      %297 = sbr.rel (%p295) target = $region25
    $region24: #{_gmp_apply.1} parent=1 // pred_region
      %v298 = vld [vmem:[%s2] sm:$0xf]
      %v299 = vld [vmem:[#allocation2] sm:$0xff]
      %v300 = vld [vmem:[#allocation2 + $0x8] sm:$0xff]
      %v301 = vld [vmem:[#allocation2 + $0x10] sm:$0xff]
      %v302 = vld [vmem:[#allocation2 + $0x18] sm:$0xff]
      %v304 = vlaneseq
      %v305 = vshrl.u32 %v304, 7
      %v306 = vsub.s32 0, %v305
      %v307 = vrot.slane %v298, %v306
      %v308 = vlaneseq
      %v309 = vshrl.u32 %v308, 7
      %v310 = vsub.s32 2, %v309
      %v311 = vrot.slane %v298, %v310
      %v314 = vlaneseq
      %v315 = vshrl.u32 %v314, 7
      %v316 = vsub.s32 0, %v315
      %v317 = vrot.slane %v307, %v316
      %v318 = vlaneseq
      %v319 = vshrl.u32 %v318, 7
      %v320 = vsub.s32 0, %v319
      %v321 = vrot.slane %v311, %v320
      %v322 = vmul.f32 %v299, %v317
      %v323 = vmul.f32 %v300, %v321
      %v324 = vmul.f32 %v301, %v317
      %v325 = vmul.f32 %v302, %v321
      %v326 = vlaneseq
      %v327 = vshrl.u32 %v326, 7
      %v328 = vsub.s32 1, %v327
      %v329 = vrot.slane %v298, %v328
      %v330 = vlaneseq
      %v331 = vshrl.u32 %v330, 7
      %v332 = vsub.s32 3, %v331
      %v333 = vrot.slane %v298, %v332
      %v336 = vlaneseq
      %v337 = vshrl.u32 %v336, 7
      %v338 = vsub.s32 1, %v337
      %v339 = vrot.slane %v329, %v338
      %v340 = vlaneseq
      %v341 = vshrl.u32 %v340, 7
      %v342 = vsub.s32 1, %v341
      %v343 = vrot.slane %v333, %v342
      %v344 = vadd.f32 %v322, %v339
      %v345 = vadd.f32 %v323, %v343
      %v346 = vadd.f32 %v324, %v339
      %v347 = vadd.f32 %v325, %v343
      %348 = vst [vmem:[%s3] sm:$0xff] %v344
      %349 = vst [vmem:[%s3 + $0x8] sm:$0xff] %v345
      %350 = vst [vmem:[%s3 + $0x10] sm:$0xff] %v346
      %351 = vst [vmem:[%s3 + $0x18] sm:$0xff] %v347
    $region25: #{_gmp_apply.1} parent=1 // pred_fallthru
      _
    // Predicated region
    $region26: #{_gmp_apply.1} parent=1 // pred_check
      _
    $region27: #{_gmp_apply.1} parent=1 // pred_check_branch
      %353 = sbr.rel (0) target = $region29
    $region28: #{_gmp_apply.1} parent=1 // pred_region
      _
    $region29: #{_gmp_apply.1} parent=1 // pred_fallthru
      _
    // Predicated region
    $region30: #{_gmp_apply.1} parent=1 // pred_check
      _
    $region31: #{_gmp_apply.1} parent=1 // pred_check_branch
      %355 = sbr.rel (0) target = $region33
    $region32: #{_gmp_apply.1} parent=1 // pred_region
      _
    $region33: #{_gmp_apply.1} parent=1 // pred_fallthru
      _
    %356 = vsyncpa [#allocation4], 1

</llo_original>
